<compile_context>
chip_gen: v7x
topology: tpu7x:2x2x1
jax: 0.10.0
libtpu: 0.0.40
codegen_flags: <defaults>
</compile_context>

<pallas_src>
import functools
import math

import jax
import jax.numpy as jnp
from jax import lax
from jax.experimental import pallas as pl
from jax.experimental.pallas import tpu as pltpu


def _round_up(x, m):
    return (x + m - 1) // m * m


_VMEM_BUDGET = 40 * 1024 * 1024      # conservative vs. v7x 64 MiB physical / TC
_VMEM_LIMIT_CAP = 48 * 1024 * 1024   # never request more scoped VMEM than this


def _kernel_full_k(x_ref, w_ref, b_ref, o_ref, *, precision):
    # Whole hidden stripe resident: no accumulator, no init/finalize phases.
    # x_ref: (TM, Hp), w_ref: (TN, Hp) in (I, H) layout, b_ref: (1, TN), o_ref: (TM, TN)
    y = lax.dot_general(
        x_ref[...],
        w_ref[...],
        dimension_numbers=(((1,), (1,)), ((), ())),   # x @ w.T (native transposed RHS)
        preferred_element_type=jnp.float32,
        precision=precision,
    )
    y = y + b_ref[...].astype(jnp.float32)
    o_ref[...] = jnp.maximum(y, 0.0).astype(o_ref.dtype)


def _kernel_split_k(x_ref, w_ref, b_ref, o_ref, acc_ref, *, precision):
    # K-split path for hidden sizes whose full stripe would not fit VMEM.
    k = pl.program_id(2)

    @pl.when(k == 0)
    def _():
        acc_ref[...] = jnp.zeros_like(acc_ref)

    acc_ref[...] += lax.dot_general(
        x_ref[...],
        w_ref[...],
        dimension_numbers=(((1,), (1,)), ((), ())),
        preferred_element_type=jnp.float32,
        precision=precision,
    )

    @pl.when(k == pl.num_programs(2) - 1)
    def _():
        y = acc_ref[...] + b_ref[...].astype(jnp.float32)
        o_ref[...] = jnp.maximum(y, 0.0).astype(o_ref.dtype)


def intermediate_forward(hidden_states, weight, bias, *, precision=None):
    """hidden_states: (B, S, H); weight: (I, H); bias: (I,). Returns (B, S, I)."""
    B, S, H = hidden_states.shape
    I = weight.shape[0]
    M = B * S

    x2d = hidden_states.reshape(M, H)
    out_dtype = hidden_states.dtype
    x_sz = jnp.dtype(hidden_states.dtype).itemsize
    w_sz = jnp.dtype(weight.dtype).itemsize
    b_sz = jnp.dtype(bias.dtype).itemsize
    o_sz = jnp.dtype(out_dtype).itemsize

    if precision is None:
        # f32 parity with PyTorch nn.Linear; bf16 stays on the fast MXU path.
        precision = (
            lax.Precision.HIGHEST
            if hidden_states.dtype == jnp.float32
            else lax.Precision.DEFAULT
        )

    # ------------------------- tile selection -------------------------
    Ip = _round_up(I, 128)      # lane alignment; weight padded only if I ragged
    Hp = _round_up(H, 128)
    TM = min(512, _round_up(M, 16))      # sublane-safe for f32 and bf16
    Mp = _round_up(M, TM)

    # Largest TN in {512, 256, 128} dividing Ip -> no padding beyond lane alignment.
    TN = next(t for t in (512, 256, 128) if Ip % t == 0)

    # v7x: if the M axis is one tile, split N across the two TensorCores.
    if Mp // TM == 1 and Ip // TN == 1 and Ip >= 256 and (Ip // 2) % 128 == 0:
        TN = Ip // 2

    def _footprint(tk, with_acc):
        fp = 2 * TM * tk * x_sz + 2 * TN * tk * w_sz + 2 * TM * TN * o_sz
        fp += 2 * TN * b_sz
        if with_acc:
            fp += TM * TN * 4
        return fp

    if _footprint(Hp, with_acc=False) <= _VMEM_BUDGET:
        # Full-K stripe: drop reduction axis, accumulator and phase gating.
        TK = Hp
        split_k = False
    else:
        TK = next(t for t in (1024, 512, 256, 128) if Hp % t == 0)
        while _footprint(TK, with_acc=True) > _VMEM_BUDGET and TK > 128:
            TK //= 2
        split_k = True

    grid_m = Mp // TM
    grid_n = Ip // TN

    # --------------------------- padding -----------------------------
    # Only applied to dims that are actually ragged (padded zeros are inert for
    # the matmul; padded output rows/cols are sliced off below).
    xp = x2d if (Mp == M and Hp == H) else jnp.pad(x2d, ((0, Mp - M), (0, Hp - H)))
    wp = weight if (Ip == I and Hp == H) else jnp.pad(weight, ((0, Ip - I), (0, Hp - H)))
    bp = (bias if Ip == I else jnp.pad(bias, (0, Ip - I))).reshape(1, Ip)

    vmem_limit = int(
        min(_VMEM_LIMIT_CAP,
            max(16 * 1024 * 1024, _footprint(TK, with_acc=split_k) + (4 << 20)))
    )

    cost = pl.CostEstimate(
        flops=2 * M * I * H,
        transcendentals=0,
        bytes_accessed=(
            grid_n * Mp * Hp * x_sz      # activations re-streamed once per N stripe
            + grid_m * Ip * Hp * w_sz    # weights re-streamed once per M stripe
            + Mp * Ip * o_sz             # output written once
            + grid_m * Ip * b_sz
        ),
    )

    if split_k:
        kernel = functools.partial(_kernel_split_k, precision=precision)
        grid = (grid_m, grid_n, Hp // TK)
        in_specs = [
            pl.BlockSpec((TM, TK), lambda i, j, k: (i, k)),   # x tile
            pl.BlockSpec((TN, TK), lambda i, j, k: (j, k)),   # w tile, (I, H) layout
            pl.BlockSpec((1, TN), lambda i, j, k: (0, j)),    # bias tile
        ]
        out_specs = pl.BlockSpec((TM, TN), lambda i, j, k: (i, j))
        scratch_shapes = [pltpu.VMEM((TM, TN), jnp.float32)]
        dim_sem = ("parallel", "parallel", "arbitrary")
    else:
        kernel = functools.partial(_kernel_full_k, precision=precision)
        grid = (grid_m, grid_n)
        in_specs = [
            pl.BlockSpec((TM, TK), lambda i, j: (i, 0)),
            pl.BlockSpec((TN, TK), lambda i, j: (j, 0)),
            pl.BlockSpec((1, TN), lambda i, j: (0, j)),
        ]
        out_specs = pl.BlockSpec((TM, TN), lambda i, j: (i, j))
        scratch_shapes = []
        dim_sem = ("parallel", "parallel")

    out2d = pl.pallas_call(
        kernel,
        out_shape=jax.ShapeDtypeStruct((Mp, Ip), out_dtype),
        grid_spec=pltpu.PrefetchScalarGridSpec(
            num_scalar_prefetch=0,
            grid=grid,
            in_specs=in_specs,
            out_specs=out_specs,
            scratch_shapes=scratch_shapes,
        ),
        compiler_params=pltpu.CompilerParams(
            dimension_semantics=dim_sem,
            vmem_limit_bytes=vmem_limit,
        ),
        cost_estimate=cost,
    )(xp, wp, bp)

    if Mp != M or Ip != I:
        out2d = out2d[:M, :I]
    return out2d.reshape(B, S, I)


def _reference(hidden_states, weight, bias):
    return jnp.maximum(
        jnp.einsum("bsh,ih->bsi", hidden_states, weight,
                   precision=lax.Precision.HIGHEST) + bias,
        0.0,
    )


if __name__ == "__main__":
    key = jax.random.PRNGKey(0)

    # --- Test 1: small, ragged shapes (exercises the padding path) ---
    batch, seq, hidden_size, intermediate_size = 2, 8, 32, 64
    k1, k2, k3, key = jax.random.split(key, 4)
    hs = jax.random.normal(k1, (batch, seq, hidden_size), dtype=jnp.float32)
    bound = 1.0 / math.sqrt(hidden_size)
    w = jax.random.uniform(k2, (intermediate_size, hidden_size), dtype=jnp.float32,
                           minval=-bound, maxval=bound)
    b = jax.random.uniform(k3, (intermediate_size,), dtype=jnp.float32,
                           minval=-bound, maxval=bound)

    out = jax.block_until_ready(intermediate_forward(hs, w, b))
    ref = _reference(hs, w, b)
    assert out.shape == (batch, seq, intermediate_size)
    assert jnp.allclose(out, ref, atol=1e-5, rtol=1e-5)

    # --- Test 2: lane-aligned shapes (no padding, full-K fast path) ---
    batch, seq, hidden_size, intermediate_size = 2, 64, 256, 512
    k1, k2, k3, key = jax.random.split(key, 4)
    hs = jax.random.normal(k1, (batch, seq, hidden_size), dtype=jnp.float32)
    bound = 1.0 / math.sqrt(hidden_size)
    w = jax.random.uniform(k2, (intermediate_size, hidden_size), dtype=jnp.float32,
                           minval=-bound, maxval=bound)
    b = jax.random.uniform(k3, (intermediate_size,), dtype=jnp.float32,
                           minval=-bound, maxval=bound)

    out = jax.block_until_ready(intermediate_forward(hs, w, b))
    ref = _reference(hs, w, b)
    assert out.shape == (batch, seq, intermediate_size)
    assert jnp.allclose(out, ref, atol=1e-4, rtol=1e-4)

    print("KERNEL_OK")
</pallas_src>

<mosaic_0001>
module attributes {stable_mosaic.version = 11 : i64} {
  func.func @_kernel_full_k(%arg0: i32, %arg1: i32, %arg2: memref<16x128xf32, #tpu.memory_space<vmem>>, %arg3: memref<128x128xf32, #tpu.memory_space<vmem>>, %arg4: memref<1x128xf32, #tpu.memory_space<vmem>>, %arg5: memref<16x128xf32, #tpu.memory_space<vmem>>) attributes {dimension_semantics = [#tpu.dimension_semantics<parallel>, #tpu.dimension_semantics<parallel>], iteration_bounds = array<i64: 1, 1>, scalar_prefetch = 0 : i64, scratch_operands = 0 : i64, tpu.core_type = #tpu.core_type<tc>, window_params = [{transform_indices = @transform_0, window_bounds = array<i64: 16, 128>}, {transform_indices = @transform_1, window_bounds = array<i64: 128, 128>}, {transform_indices = @transform_2, window_bounds = array<i64: 1, 128>}, {transform_indices = @transform_3, window_bounds = array<i64: 16, 128>}]} {
    %c0 = arith.constant 0 : index
    %c0_0 = arith.constant 0 : index
    %0 = vector.load %arg2[%c0, %c0_0] : memref<16x128xf32, #tpu.memory_space<vmem>>, vector<16x128xf32>
    %c0_1 = arith.constant 0 : index
    %c0_2 = arith.constant 0 : index
    %1 = vector.load %arg3[%c0_1, %c0_2] : memref<128x128xf32, #tpu.memory_space<vmem>>, vector<128x128xf32>
    %cst = arith.constant dense<0.000000e+00> : vector<16x128xf32>
    %2 = tpu.matmul %0, %1, %cst {dimension_numbers = #tpu.dot_dimension_numbers<[1], [1], [0], [0], [0, 0, 1, 0], [], []>, precision = #tpu.contract_precision<fp32>} : vector<16x128xf32>, vector<128x128xf32>, vector<16x128xf32> -> vector<16x128xf32>
    %c0_3 = arith.constant 0 : index
    %c0_4 = arith.constant 0 : index
    %3 = vector.load %arg4[%c0_3, %c0_4] : memref<1x128xf32, #tpu.memory_space<vmem>>, vector<1x128xf32>
    %4 = vector.broadcast %3 : vector<1x128xf32> to vector<16x128xf32>
    %5 = arith.addf %2, %4 : vector<16x128xf32>
    %cst_5 = arith.constant 0.000000e+00 : f32
    %6 = vector.broadcast %cst_5 : f32 to vector<16x128xf32>
    %7 = arith.maximumf %5, %6 : vector<16x128xf32>
    %c0_6 = arith.constant 0 : index
    %c0_7 = arith.constant 0 : index
    %8 = vector.load %arg5[%c0_6, %c0_7] : memref<16x128xf32, #tpu.memory_space<vmem>>, vector<16x128xf32>
    tpu.vector_store %arg5[%c0_6, %c0_7], %7 {strides = array<i32>} : memref<16x128xf32, #tpu.memory_space<vmem>>, vector<16x128xf32>,
    return
  }
  func.func @transform_0(%arg0: i32, %arg1: i32) -> (i32, i32) {
    %c0_i32 = arith.constant 0 : i32
    %c0_i32_0 = arith.constant 0 : i32
    return %arg0, %c0_i32 : i32, i32
  }
  func.func @transform_1(%arg0: i32, %arg1: i32) -> (i32, i32) {
    %c0_i32 = arith.constant 0 : i32
    %c0_i32_0 = arith.constant 0 : i32
    return %arg1, %c0_i32 : i32, i32
  }
  func.func @transform_2(%arg0: i32, %arg1: i32) -> (i32, i32) {
    %c0_i32 = arith.constant 0 : i32
    %c0_i32_0 = arith.constant 0 : i32
    return %c0_i32, %arg1 : i32, i32
  }
  func.func @transform_3(%arg0: i32, %arg1: i32) -> (i32, i32) {
    %c0_i32 = arith.constant 0 : i32
    return %arg0, %arg1 : i32, i32
  }
}

</mosaic_0001>

<llo_original>
// kernel: tpu_custom_call.1
$region0: #{tpu_custom_call.1}
  #allocation0 [shape = 'u32[]', space=smem, size = 0x4, offset = 0x4, fixed_abs, tag = 'smem constant byte address 0x4 - core index']
  #allocation1 [shape = 'u32[144,128]{1,0:T(1,128)}', space=vmem, size = 0x12000, scoped, tag = 'internal scratch']
  %s0 = inlined_call_operand.hbm [shape: f32[16,128], index: 0, kind: input, shape index: {}]
  %s1 = inlined_call_operand.hbm [shape: f32[128,128], index: 1, kind: input, shape index: {}]
  %s2 = inlined_call_operand.vmem [shape: f32[1,128], index: 2, kind: input, shape index: {}]
  %s3 = inlined_call_operand.hbm [shape: f32[16,128], index: 3, kind: output, shape index: {}]
  %s4 = sld [smem:[#allocation0]]
  $region30: #{tpu_custom_call.1} parent=0
    _
  %s6 = ssub.s32 1, %s4
  %s7 = scalar_select 0, %s6, %s4
  $region1: #{tpu_custom_call.1} parent=0
    #allocation2 [shape = 'u8[8192]{0}', space=vmem, size = 0x2000, scoped, tag = 'input window, operand 0, single buffered']
    #allocation3 [shape = 's32[1]{0}', space=sflag, size = 0x4, scoped, tag = 'scoped memory for tpu_custom_call.1']
    #allocation4 [shape = 's32[1]{0}', space=sflag, size = 0x4, scoped, tag = 'scoped memory for tpu_custom_call.1']
    #allocation5 [shape = 'u8[65536]{0}', space=vmem, size = 0x10000, scoped, tag = 'input window, operand 1, single buffered']
    #allocation6 [shape = 's32[1]{0}', space=sflag, size = 0x4, scoped, tag = 'scoped memory for tpu_custom_call.1']
    #allocation7 [shape = 'u8[8192]{0}', space=vmem, size = 0x2000, scoped, tag = 'output window, operand 0, single buffered']
    %8 = vsyncpa [#allocation3], 0
    %9 = vsyncpa [#allocation6], 0
    %10 = vsyncpa [#allocation4], 0
    // Predicated region
    $region2: #{tpu_custom_call.1} parent=1 // pred_check
      _
    $region3: #{tpu_custom_call.1} parent=1 // pred_check_branch
      %12 = sbr.rel (0) target = $region5
    $region4: #{tpu_custom_call.1} parent=1 // pred_region
      %s14 = ssub.s32 256, 256
      %15 = vsyncadd [#allocation3], %s14
      %s16 = sshll.u32 [#allocation2], 4
      %s17 = int_to_ptr.vmem [resolvable:$true] %s16
      %22 = dma.hbm_to_vmem [thread:$0]  %s0, 256, %s17, [#allocation3], 128, 128, 8
    $region5: #{tpu_custom_call.1} parent=1 // pred_fallthru
      _
    // Predicated region
    $region6: #{tpu_custom_call.1} parent=1 // pred_check
      _
    $region7: #{tpu_custom_call.1} parent=1 // pred_check_branch
      %24 = sbr.rel (0) target = $region9
    $region8: #{tpu_custom_call.1} parent=1 // pred_region
      %s26 = ssub.s32 2048, 2048
      %27 = vsyncadd [#allocation6], %s26
      %s28 = sshll.u32 [#allocation5], 4
      %s29 = int_to_ptr.vmem [resolvable:$true] %s28
      %34 = dma.hbm_to_vmem [thread:$0]  %s1, 2048, %s29, [#allocation6], 128, 128, 8
    $region9: #{tpu_custom_call.1} parent=1 // pred_fallthru
      _
    // Predicated region
    $region10: #{tpu_custom_call.1} parent=1 // pred_check
      _
    $region11: #{tpu_custom_call.1} parent=1 // pred_check_branch
      %36 = sbr.rel (0) target = $region13
    $region12: #{tpu_custom_call.1} parent=1 // pred_region
      _
    $region13: #{tpu_custom_call.1} parent=1 // pred_fallthru
      _
    // Predicated region
    $region14: #{tpu_custom_call.1} parent=1 // pred_check
      _
    $region15: #{tpu_custom_call.1} parent=1 // pred_check_branch
      %38 = sbr.rel (0) target = $region17
    $region16: #{tpu_custom_call.1} parent=1 // pred_region
      %39 = dma.done [#allocation3], 256
    $region17: #{tpu_custom_call.1} parent=1 // pred_fallthru
      _
    // Predicated region
    $region18: #{tpu_custom_call.1} parent=1 // pred_check
      _
    $region19: #{tpu_custom_call.1} parent=1 // pred_check_branch
      %41 = sbr.rel (0) target = $region21
    $region20: #{tpu_custom_call.1} parent=1 // pred_region
      %42 = dma.done [#allocation6], 2048
    $region21: #{tpu_custom_call.1} parent=1 // pred_fallthru
      _
    %v43 = vld [vmem:[#allocation2] sm:$0xff]
    %v44 = vld [vmem:[#allocation2 + $0x8] sm:$0xff]
    %v45 = vld [vmem:[#allocation5] sm:$0xff]
    %v46 = vld [vmem:[#allocation5 + $0x8] sm:$0xff]
    %v47 = vld [vmem:[#allocation5 + $0x10] sm:$0xff]
    %v48 = vld [vmem:[#allocation5 + $0x18] sm:$0xff]
    %v49 = vld [vmem:[#allocation5 + $0x20] sm:$0xff]
    %v50 = vld [vmem:[#allocation5 + $0x28] sm:$0xff]
    %v51 = vld [vmem:[#allocation5 + $0x30] sm:$0xff]
    %v52 = vld [vmem:[#allocation5 + $0x38] sm:$0xff]
    %v53 = vld [vmem:[#allocation5 + $0x40] sm:$0xff]
    %v54 = vld [vmem:[#allocation5 + $0x48] sm:$0xff]
    %v55 = vld [vmem:[#allocation5 + $0x50] sm:$0xff]
    %v56 = vld [vmem:[#allocation5 + $0x58] sm:$0xff]
    %v57 = vld [vmem:[#allocation5 + $0x60] sm:$0xff]
    %v58 = vld [vmem:[#allocation5 + $0x68] sm:$0xff]
    %v59 = vld [vmem:[#allocation5 + $0x70] sm:$0xff]
    %v60 = vld [vmem:[#allocation5 + $0x78] sm:$0xff]
    %v61 = vld [vmem:[%s2] sm:$0x1]
    %v63 = vlaneseq
    %v64 = vshrl.u32 %v63, 7
    %v65 = vsub.s32 0, %v64
    %v66 = vrot.slane %v61, %v65
    %68 = vmatprep.subr.mxu0 0.0
    %v69 = vand.u32 %v45, 4294901760
    %70 = vmatpush1.xpose.msra.mxu0 %v69
    %71 = vmatprep.subr.mxu0 0.0
    %v72 = vand.u32 %v46, 4294901760
    %73 = vmatpush1.xpose.msra.mxu0 %v72
    %74 = vmatprep.subr.mxu0 0.0
    %v75 = vand.u32 %v47, 4294901760
    %76 = vmatpush1.xpose.msra.mxu0 %v75
    %77 = vmatprep.subr.mxu0 0.0
    %v78 = vand.u32 %v48, 4294901760
    %79 = vmatpush1.xpose.msra.mxu0 %v78
    %80 = vmatprep.subr.mxu0 0.0
    %v81 = vand.u32 %v49, 4294901760
    %82 = vmatpush1.xpose.msra.mxu0 %v81
    %83 = vmatprep.subr.mxu0 0.0
    %v84 = vand.u32 %v50, 4294901760
    %85 = vmatpush1.xpose.msra.mxu0 %v84
    %86 = vmatprep.subr.mxu0 0.0
    %v87 = vand.u32 %v51, 4294901760
    %88 = vmatpush1.xpose.msra.mxu0 %v87
    %89 = vmatprep.subr.mxu0 0.0
    %v90 = vand.u32 %v52, 4294901760
    %91 = vmatpush1.xpose.msra.mxu0 %v90
    %92 = vmatprep.subr.mxu0 0.0
    %v93 = vand.u32 %v53, 4294901760
    %94 = vmatpush1.xpose.msra.mxu0 %v93
    %95 = vmatprep.subr.mxu0 0.0
    %v96 = vand.u32 %v54, 4294901760
    %97 = vmatpush1.xpose.msra.mxu0 %v96
    %98 = vmatprep.subr.mxu0 0.0
    %v99 = vand.u32 %v55, 4294901760
    %100 = vmatpush1.xpose.msra.mxu0 %v99
    %101 = vmatprep.subr.mxu0 0.0
    %v102 = vand.u32 %v56, 4294901760
    %103 = vmatpush1.xpose.msra.mxu0 %v102
    %104 = vmatprep.subr.mxu0 0.0
    %v105 = vand.u32 %v57, 4294901760
    %106 = vmatpush1.xpose.msra.mxu0 %v105
    %107 = vmatprep.subr.mxu0 0.0
    %v108 = vand.u32 %v58, 4294901760
    %109 = vmatpush1.xpose.msra.mxu0 %v108
    %110 = vmatprep.subr.mxu0 0.0
    %v111 = vand.u32 %v59, 4294901760
    %112 = vmatpush1.xpose.msra.mxu0 %v111
    %113 = vmatprep.subr.mxu0 0.0
    %v114 = vand.u32 %v60, 4294901760
    %115 = vmatpush1.xpose.msra.mxu0 %v114
    %116 = vmatprep.subr.mxu0 0.0
    %117 = vmatpush1.xpose.msra.mxu0 0.0
    %118 = vmatprep.subr.mxu0 0.0
    %119 = vmatpush1.xpose.msra.mxu0 0.0
    %120 = vmatprep.subr.mxu0 0.0
    %121 = vmatpush1.xpose.msra.mxu0 0.0
    %122 = vmatprep.subr.mxu0 0.0
    %123 = vmatpush1.xpose.msra.mxu0 0.0
    %124 = vmatprep.subr.mxu0 0.0
    %125 = vmatpush1.xpose.msra.mxu0 0.0
    %126 = vmatprep.subr.mxu0 0.0
    %127 = vmatpush1.xpose.msra.mxu0 0.0
    %128 = vmatprep.subr.mxu0 0.0
    %129 = vmatpush1.xpose.msra.mxu0 0.0
    %130 = vmatprep.subr.mxu0 0.0
    %131 = vmatpush1.xpose.msra.mxu0 0.0
    %132 = vmatprep.subr.mxu0 0.0
    %133 = vmatpush1.xpose.msra.mxu0 0.0
    %134 = vmatprep.subr.mxu0 0.0
    %135 = vmatpush1.xpose.msra.mxu0 0.0
    %136 = vmatprep.subr.mxu0 0.0
    %137 = vmatpush1.xpose.msra.mxu0 0.0
    %138 = vmatprep.subr.mxu0 0.0
    %139 = vmatpush1.xpose.msra.mxu0 0.0
    %140 = vmatprep.subr.mxu0 0.0
    %141 = vmatpush1.xpose.msra.mxu0 0.0
    %142 = vmatprep.subr.mxu0 0.0
    %143 = vmatpush1.xpose.msra.mxu0 0.0
    %144 = vmatprep.subr.mxu0 0.0
    %145 = vmatpush1.xpose.msra.mxu0 0.0
    %146 = vmatprep.subr.mxu0 0.0
    %147 = vmatpush1.xpose.msra.mxu0 0.0
    %148 = vmatprep.mubr.f32.mxu0 0.0
    %v149 = vand.u32 %v43, 4294901760
    %v150 = vsub.f32 %v43, %v149
    %v151 = vand.u32 %v150, 4294901760
    %v152 = vsub.f32 %v150, %v151
    %v153 = vand.u32 %v152, 4294901760
    %154 = vmatmul.mubr.f32.gmra.mrb[0].mxu0 %v153
    %v155 = vpop.f32.mrb[0].mxu0
    %v156 = vadd.f32 %v66, %v155
    %v157 = vpop.f32.mrb[0].mxu0
    %158 = vmatprep.mubr.f32.mxu0 0.0
    %v159 = vand.u32 %v44, 4294901760
    %v160 = vsub.f32 %v44, %v159
    %v161 = vand.u32 %v160, 4294901760
    %v162 = vsub.f32 %v160, %v161
    %v163 = vand.u32 %v162, 4294901760
    %164 = vmatmul.mubr.f32.gmra.mrb[0].mxu0 %v163
    %v165 = vpop.f32.mrb[0].mxu0
    %v166 = vadd.f32 %v66, %v165
    %v167 = vpop.f32.mrb[0].mxu0
    %168 = vdwg.mxu0
    %169 = vmatprep.subr.mxu0 0.0
    %v170 = vand.u32 %v45, 4294901760
    %v171 = vsub.f32 %v45, %v170
    %v172 = vand.u32 %v171, 4294901760
    %v173 = vsub.f32 %v171, %v172
    %v174 = vand.u32 %v173, 4294901760
    %175 = vmatpush1.xpose.msra.mxu0 %v174
    %176 = vmatprep.subr.mxu0 0.0
    %v177 = vand.u32 %v46, 4294901760
    %v178 = vsub.f32 %v46, %v177
    %v179 = vand.u32 %v178, 4294901760
    %v180 = vsub.f32 %v178, %v179
    %v181 = vand.u32 %v180, 4294901760
    %182 = vmatpush1.xpose.msra.mxu0 %v181
    %183 = vmatprep.subr.mxu0 0.0
    %v184 = vand.u32 %v47, 4294901760
    %v185 = vsub.f32 %v47, %v184
    %v186 = vand.u32 %v185, 4294901760
    %v187 = vsub.f32 %v185, %v186
    %v188 = vand.u32 %v187, 4294901760
    %189 = vmatpush1.xpose.msra.mxu0 %v188
    %190 = vmatprep.subr.mxu0 0.0
    %v191 = vand.u32 %v48, 4294901760
    %v192 = vsub.f32 %v48, %v191
    %v193 = vand.u32 %v192, 4294901760
    %v194 = vsub.f32 %v192, %v193
    %v195 = vand.u32 %v194, 4294901760
    %196 = vmatpush1.xpose.msra.mxu0 %v195
    %197 = vmatprep.subr.mxu0 0.0
    %v198 = vand.u32 %v49, 4294901760
    %v199 = vsub.f32 %v49, %v198
    %v200 = vand.u32 %v199, 4294901760
    %v201 = vsub.f32 %v199, %v200
    %v202 = vand.u32 %v201, 4294901760
    %203 = vmatpush1.xpose.msra.mxu0 %v202
    %204 = vmatprep.subr.mxu0 0.0
    %v205 = vand.u32 %v50, 4294901760
    %v206 = vsub.f32 %v50, %v205
    %v207 = vand.u32 %v206, 4294901760
    %v208 = vsub.f32 %v206, %v207
    %v209 = vand.u32 %v208, 4294901760
    %210 = vmatpush1.xpose.msra.mxu0 %v209
    %211 = vmatprep.subr.mxu0 0.0
    %v212 = vand.u32 %v51, 4294901760
    %v213 = vsub.f32 %v51, %v212
    %v214 = vand.u32 %v213, 4294901760
    %v215 = vsub.f32 %v213, %v214
    %v216 = vand.u32 %v215, 4294901760
    %217 = vmatpush1.xpose.msra.mxu0 %v216
    %218 = vmatprep.subr.mxu0 0.0
    %v219 = vand.u32 %v52, 4294901760
    %v220 = vsub.f32 %v52, %v219
    %v221 = vand.u32 %v220, 4294901760
    %v222 = vsub.f32 %v220, %v221
    %v223 = vand.u32 %v222, 4294901760
    %224 = vmatpush1.xpose.msra.mxu0 %v223
    %225 = vmatprep.subr.mxu0 0.0
    %v226 = vand.u32 %v53, 4294901760
    %v227 = vsub.f32 %v53, %v226
    %v228 = vand.u32 %v227, 4294901760
    %v229 = vsub.f32 %v227, %v228
    %v230 = vand.u32 %v229, 4294901760
    %231 = vmatpush1.xpose.msra.mxu0 %v230
    %232 = vmatprep.subr.mxu0 0.0
    %v233 = vand.u32 %v54, 4294901760
    %v234 = vsub.f32 %v54, %v233
    %v235 = vand.u32 %v234, 4294901760
    %v236 = vsub.f32 %v234, %v235
    %v237 = vand.u32 %v236, 4294901760
    %238 = vmatpush1.xpose.msra.mxu0 %v237
    %239 = vmatprep.subr.mxu0 0.0
    %v240 = vand.u32 %v55, 4294901760
    %v241 = vsub.f32 %v55, %v240
    %v242 = vand.u32 %v241, 4294901760
    %v243 = vsub.f32 %v241, %v242
    %v244 = vand.u32 %v243, 4294901760
    %245 = vmatpush1.xpose.msra.mxu0 %v244
    %246 = vmatprep.subr.mxu0 0.0
    %v247 = vand.u32 %v56, 4294901760
    %v248 = vsub.f32 %v56, %v247
    %v249 = vand.u32 %v248, 4294901760
    %v250 = vsub.f32 %v248, %v249
    %v251 = vand.u32 %v250, 4294901760
    %252 = vmatpush1.xpose.msra.mxu0 %v251
    %253 = vmatprep.subr.mxu0 0.0
    %v254 = vand.u32 %v57, 4294901760
    %v255 = vsub.f32 %v57, %v254
    %v256 = vand.u32 %v255, 4294901760
    %v257 = vsub.f32 %v255, %v256
    %v258 = vand.u32 %v257, 4294901760
    %259 = vmatpush1.xpose.msra.mxu0 %v258
    %260 = vmatprep.subr.mxu0 0.0
    %v261 = vand.u32 %v58, 4294901760
    %v262 = vsub.f32 %v58, %v261
    %v263 = vand.u32 %v262, 4294901760
    %v264 = vsub.f32 %v262, %v263
    %v265 = vand.u32 %v264, 4294901760
    %266 = vmatpush1.xpose.msra.mxu0 %v265
    %267 = vmatprep.subr.mxu0 0.0
    %v268 = vand.u32 %v59, 4294901760
    %v269 = vsub.f32 %v59, %v268
    %v270 = vand.u32 %v269, 4294901760
    %v271 = vsub.f32 %v269, %v270
    %v272 = vand.u32 %v271, 4294901760
    %273 = vmatpush1.xpose.msra.mxu0 %v272
    %274 = vmatprep.subr.mxu0 0.0
    %v275 = vand.u32 %v60, 4294901760
    %v276 = vsub.f32 %v60, %v275
    %v277 = vand.u32 %v276, 4294901760
    %v278 = vsub.f32 %v276, %v277
    %v279 = vand.u32 %v278, 4294901760
    %280 = vmatpush1.xpose.msra.mxu0 %v279
    %281 = vmatprep.subr.mxu0 0.0
    %282 = vmatpush1.xpose.msra.mxu0 0.0
    %283 = vmatprep.subr.mxu0 0.0
    %284 = vmatpush1.xpose.msra.mxu0 0.0
    %285 = vmatprep.subr.mxu0 0.0
    %286 = vmatpush1.xpose.msra.mxu0 0.0
    %287 = vmatprep.subr.mxu0 0.0
    %288 = vmatpush1.xpose.msra.mxu0 0.0
    %289 = vmatprep.subr.mxu0 0.0
    %290 = vmatpush1.xpose.msra.mxu0 0.0
    %291 = vmatprep.subr.mxu0 0.0
    %292 = vmatpush1.xpose.msra.mxu0 0.0
    %293 = vmatprep.subr.mxu0 0.0
    %294 = vmatpush1.xpose.msra.mxu0 0.0
    %295 = vmatprep.subr.mxu0 0.0
    %296 = vmatpush1.xpose.msra.mxu0 0.0
    %297 = vmatprep.subr.mxu0 0.0
    %298 = vmatpush1.xpose.msra.mxu0 0.0
    %299 = vmatprep.subr.mxu0 0.0
    %300 = vmatpush1.xpose.msra.mxu0 0.0
    %301 = vmatprep.subr.mxu0 0.0
    %302 = vmatpush1.xpose.msra.mxu0 0.0
    %303 = vmatprep.subr.mxu0 0.0
    %304 = vmatpush1.xpose.msra.mxu0 0.0
    %305 = vmatprep.subr.mxu0 0.0
    %306 = vmatpush1.xpose.msra.mxu0 0.0
    %307 = vmatprep.subr.mxu0 0.0
    %308 = vmatpush1.xpose.msra.mxu0 0.0
    %309 = vmatprep.subr.mxu0 0.0
    %310 = vmatpush1.xpose.msra.mxu0 0.0
    %311 = vmatprep.subr.mxu0 0.0
    %312 = vmatpush1.xpose.msra.mxu0 0.0
    %313 = vmatprep.mubr.f32.mxu0 0.0
    %v314 = vand.u32 %v43, 4294901760
    %315 = vmatmul.mubr.f32.gmra.mrb[0].mxu0 %v314
    %v316 = vpop.f32.mrb[0].mxu0
    %v317 = vadd.f32 %v156, %v316
    %v318 = vpop.f32.mrb[0].mxu0
    %319 = vmatprep.mubr.f32.mxu0 0.0
    %v320 = vand.u32 %v44, 4294901760
    %321 = vmatmul.mubr.f32.gmra.mrb[0].mxu0 %v320
    %v322 = vpop.f32.mrb[0].mxu0
    %v323 = vadd.f32 %v166, %v322
    %v324 = vpop.f32.mrb[0].mxu0
    %325 = vdwg.mxu0
    %326 = vmatprep.subr.mxu0 0.0
    %v327 = vand.u32 %v45, 4294901760
    %v328 = vsub.f32 %v45, %v327
    %329 = vmatpush1.xpose.msra.mxu0 %v328
    %330 = vmatprep.subr.mxu0 0.0
    %v331 = vand.u32 %v46, 4294901760
    %v332 = vsub.f32 %v46, %v331
    %333 = vmatpush1.xpose.msra.mxu0 %v332
    %334 = vmatprep.subr.mxu0 0.0
    %v335 = vand.u32 %v47, 4294901760
    %v336 = vsub.f32 %v47, %v335
    %337 = vmatpush1.xpose.msra.mxu0 %v336
    %338 = vmatprep.subr.mxu0 0.0
    %v339 = vand.u32 %v48, 4294901760
    %v340 = vsub.f32 %v48, %v339
    %341 = vmatpush1.xpose.msra.mxu0 %v340
    %342 = vmatprep.subr.mxu0 0.0
    %v343 = vand.u32 %v49, 4294901760
    %v344 = vsub.f32 %v49, %v343
    %345 = vmatpush1.xpose.msra.mxu0 %v344
    %346 = vmatprep.subr.mxu0 0.0
    %v347 = vand.u32 %v50, 4294901760
    %v348 = vsub.f32 %v50, %v347
    %349 = vmatpush1.xpose.msra.mxu0 %v348
    %350 = vmatprep.subr.mxu0 0.0
    %v351 = vand.u32 %v51, 4294901760
    %v352 = vsub.f32 %v51, %v351
    %353 = vmatpush1.xpose.msra.mxu0 %v352
    %354 = vmatprep.subr.mxu0 0.0
    %v355 = vand.u32 %v52, 4294901760
    %v356 = vsub.f32 %v52, %v355
    %357 = vmatpush1.xpose.msra.mxu0 %v356
    %358 = vmatprep.subr.mxu0 0.0
    %v359 = vand.u32 %v53, 4294901760
    %v360 = vsub.f32 %v53, %v359
    %361 = vmatpush1.xpose.msra.mxu0 %v360
    %362 = vmatprep.subr.mxu0 0.0
    %v363 = vand.u32 %v54, 4294901760
    %v364 = vsub.f32 %v54, %v363
    %365 = vmatpush1.xpose.msra.mxu0 %v364
    %366 = vmatprep.subr.mxu0 0.0
    %v367 = vand.u32 %v55, 4294901760
    %v368 = vsub.f32 %v55, %v367
    %369 = vmatpush1.xpose.msra.mxu0 %v368
    %370 = vmatprep.subr.mxu0 0.0
    %v371 = vand.u32 %v56, 4294901760
    %v372 = vsub.f32 %v56, %v371
    %373 = vmatpush1.xpose.msra.mxu0 %v372
    %374 = vmatprep.subr.mxu0 0.0
    %v375 = vand.u32 %v57, 4294901760
    %v376 = vsub.f32 %v57, %v375
    %377 = vmatpush1.xpose.msra.mxu0 %v376
    %378 = vmatprep.subr.mxu0 0.0
    %v379 = vand.u32 %v58, 4294901760
    %v380 = vsub.f32 %v58, %v379
    %381 = vmatpush1.xpose.msra.mxu0 %v380
    %382 = vmatprep.subr.mxu0 0.0
    %v383 = vand.u32 %v59, 4294901760
    %v384 = vsub.f32 %v59, %v383
    %385 = vmatpush1.xpose.msra.mxu0 %v384
    %386 = vmatprep.subr.mxu0 0.0
    %v387 = vand.u32 %v60, 4294901760
    %v388 = vsub.f32 %v60, %v387
    %389 = vmatpush1.xpose.msra.mxu0 %v388
    %390 = vmatprep.subr.mxu0 0.0
    %391 = vmatpush1.xpose.msra.mxu0 0.0
    %392 = vmatprep.subr.mxu0 0.0
    %393 = vmatpush1.xpose.msra.mxu0 0.0
    %394 = vmatprep.subr.mxu0 0.0
    %395 = vmatpush1.xpose.msra.mxu0 0.0
    %396 = vmatprep.subr.mxu0 0.0
    %397 = vmatpush1.xpose.msra.mxu0 0.0
    %398 = vmatprep.subr.mxu0 0.0
    %399 = vmatpush1.xpose.msra.mxu0 0.0
    %400 = vmatprep.subr.mxu0 0.0
    %401 = vmatpush1.xpose.msra.mxu0 0.0
    %402 = vmatprep.subr.mxu0 0.0
    %403 = vmatpush1.xpose.msra.mxu0 0.0
    %404 = vmatprep.subr.mxu0 0.0
    %405 = vmatpush1.xpose.msra.mxu0 0.0
    %406 = vmatprep.subr.mxu0 0.0
    %407 = vmatpush1.xpose.msra.mxu0 0.0
    %408 = vmatprep.subr.mxu0 0.0
    %409 = vmatpush1.xpose.msra.mxu0 0.0
    %410 = vmatprep.subr.mxu0 0.0
    %411 = vmatpush1.xpose.msra.mxu0 0.0
    %412 = vmatprep.subr.mxu0 0.0
    %413 = vmatpush1.xpose.msra.mxu0 0.0
    %414 = vmatprep.subr.mxu0 0.0
    %415 = vmatpush1.xpose.msra.mxu0 0.0
    %416 = vmatprep.subr.mxu0 0.0
    %417 = vmatpush1.xpose.msra.mxu0 0.0
    %418 = vmatprep.subr.mxu0 0.0
    %419 = vmatpush1.xpose.msra.mxu0 0.0
    %420 = vmatprep.subr.mxu0 0.0
    %421 = vmatpush1.xpose.msra.mxu0 0.0
    %422 = vmatprep.mubr.f32.mxu0 0.0
    %v423 = vand.u32 %v43, 4294901760
    %v424 = vsub.f32 %v43, %v423
    %425 = vmatmul.mubr.f32.gmra.mrb[0].mxu0 %v424
    %v426 = vpop.f32.mrb[0].mxu0
    %v427 = vadd.f32 %v317, %v426
    %v428 = vpop.f32.mrb[0].mxu0
    %429 = vmatprep.mubr.f32.mxu0 0.0
    %v430 = vand.u32 %v44, 4294901760
    %v431 = vsub.f32 %v44, %v430
    %432 = vmatmul.mubr.f32.gmra.mrb[0].mxu0 %v431
    %v433 = vpop.f32.mrb[0].mxu0
    %v434 = vadd.f32 %v323, %v433
    %v435 = vpop.f32.mrb[0].mxu0
    %436 = vdwg.mxu0
    %437 = vmatprep.subr.mxu0 0.0
    %v438 = vand.u32 %v45, 4294901760
    %439 = vmatpush1.xpose.msra.mxu0 %v438
    %440 = vmatprep.subr.mxu0 0.0
    %v441 = vand.u32 %v46, 4294901760
    %442 = vmatpush1.xpose.msra.mxu0 %v441
    %443 = vmatprep.subr.mxu0 0.0
    %v444 = vand.u32 %v47, 4294901760
    %445 = vmatpush1.xpose.msra.mxu0 %v444
    %446 = vmatprep.subr.mxu0 0.0
    %v447 = vand.u32 %v48, 4294901760
    %448 = vmatpush1.xpose.msra.mxu0 %v447
    %449 = vmatprep.subr.mxu0 0.0
    %v450 = vand.u32 %v49, 4294901760
    %451 = vmatpush1.xpose.msra.mxu0 %v450
    %452 = vmatprep.subr.mxu0 0.0
    %v453 = vand.u32 %v50, 4294901760
    %454 = vmatpush1.xpose.msra.mxu0 %v453
    %455 = vmatprep.subr.mxu0 0.0
    %v456 = vand.u32 %v51, 4294901760
    %457 = vmatpush1.xpose.msra.mxu0 %v456
    %458 = vmatprep.subr.mxu0 0.0
    %v459 = vand.u32 %v52, 4294901760
    %460 = vmatpush1.xpose.msra.mxu0 %v459
    %461 = vmatprep.subr.mxu0 0.0
    %v462 = vand.u32 %v53, 4294901760
    %463 = vmatpush1.xpose.msra.mxu0 %v462
    %464 = vmatprep.subr.mxu0 0.0
    %v465 = vand.u32 %v54, 4294901760
    %466 = vmatpush1.xpose.msra.mxu0 %v465
    %467 = vmatprep.subr.mxu0 0.0
    %v468 = vand.u32 %v55, 4294901760
    %469 = vmatpush1.xpose.msra.mxu0 %v468
    %470 = vmatprep.subr.mxu0 0.0
    %v471 = vand.u32 %v56, 4294901760
    %472 = vmatpush1.xpose.msra.mxu0 %v471
    %473 = vmatprep.subr.mxu0 0.0
    %v474 = vand.u32 %v57, 4294901760
    %475 = vmatpush1.xpose.msra.mxu0 %v474
    %476 = vmatprep.subr.mxu0 0.0
    %v477 = vand.u32 %v58, 4294901760
    %478 = vmatpush1.xpose.msra.mxu0 %v477
    %479 = vmatprep.subr.mxu0 0.0
    %v480 = vand.u32 %v59, 4294901760
    %481 = vmatpush1.xpose.msra.mxu0 %v480
    %482 = vmatprep.subr.mxu0 0.0
    %v483 = vand.u32 %v60, 4294901760
    %484 = vmatpush1.xpose.msra.mxu0 %v483
    %485 = vmatprep.subr.mxu0 0.0
    %486 = vmatpush1.xpose.msra.mxu0 0.0
    %487 = vmatprep.subr.mxu0 0.0
    %488 = vmatpush1.xpose.msra.mxu0 0.0
    %489 = vmatprep.subr.mxu0 0.0
    %490 = vmatpush1.xpose.msra.mxu0 0.0
    %491 = vmatprep.subr.mxu0 0.0
    %492 = vmatpush1.xpose.msra.mxu0 0.0
    %493 = vmatprep.subr.mxu0 0.0
    %494 = vmatpush1.xpose.msra.mxu0 0.0
    %495 = vmatprep.subr.mxu0 0.0
    %496 = vmatpush1.xpose.msra.mxu0 0.0
    %497 = vmatprep.subr.mxu0 0.0
    %498 = vmatpush1.xpose.msra.mxu0 0.0
    %499 = vmatprep.subr.mxu0 0.0
    %500 = vmatpush1.xpose.msra.mxu0 0.0
    %501 = vmatprep.subr.mxu0 0.0
    %502 = vmatpush1.xpose.msra.mxu0 0.0
    %503 = vmatprep.subr.mxu0 0.0
    %504 = vmatpush1.xpose.msra.mxu0 0.0
    %505 = vmatprep.subr.mxu0 0.0
    %506 = vmatpush1.xpose.msra.mxu0 0.0
    %507 = vmatprep.subr.mxu0 0.0
    %508 = vmatpush1.xpose.msra.mxu0 0.0
    %509 = vmatprep.subr.mxu0 0.0
    %510 = vmatpush1.xpose.msra.mxu0 0.0
    %511 = vmatprep.subr.mxu0 0.0
    %512 = vmatpush1.xpose.msra.mxu0 0.0
    %513 = vmatprep.subr.mxu0 0.0
    %514 = vmatpush1.xpose.msra.mxu0 0.0
    %515 = vmatprep.subr.mxu0 0.0
    %516 = vmatpush1.xpose.msra.mxu0 0.0
    %517 = vmatprep.mubr.f32.mxu0 0.0
    %v518 = vand.u32 %v43, 4294901760
    %v519 = vsub.f32 %v43, %v518
    %v520 = vand.u32 %v519, 4294901760
    %521 = vmatmul.mubr.f32.gmra.mrb[0].mxu0 %v520
    %v522 = vpop.f32.mrb[0].mxu0
    %v523 = vadd.f32 %v427, %v522
    %v524 = vpop.f32.mrb[0].mxu0
    %525 = vmatprep.mubr.f32.mxu0 0.0
    %v526 = vand.u32 %v44, 4294901760
    %v527 = vsub.f32 %v44, %v526
    %v528 = vand.u32 %v527, 4294901760
    %529 = vmatmul.mubr.f32.gmra.mrb[0].mxu0 %v528
    %v530 = vpop.f32.mrb[0].mxu0
    %v531 = vadd.f32 %v434, %v530
    %v532 = vpop.f32.mrb[0].mxu0
    %533 = vdwg.mxu0
    %534 = vmatprep.subr.mxu0 0.0
    %v535 = vand.u32 %v45, 4294901760
    %v536 = vsub.f32 %v45, %v535
    %v537 = vand.u32 %v536, 4294901760
    %538 = vmatpush1.xpose.msra.mxu0 %v537
    %539 = vmatprep.subr.mxu0 0.0
    %v540 = vand.u32 %v46, 4294901760
    %v541 = vsub.f32 %v46, %v540
    %v542 = vand.u32 %v541, 4294901760
    %543 = vmatpush1.xpose.msra.mxu0 %v542
    %544 = vmatprep.subr.mxu0 0.0
    %v545 = vand.u32 %v47, 4294901760
    %v546 = vsub.f32 %v47, %v545
    %v547 = vand.u32 %v546, 4294901760
    %548 = vmatpush1.xpose.msra.mxu0 %v547
    %549 = vmatprep.subr.mxu0 0.0
    %v550 = vand.u32 %v48, 4294901760
    %v551 = vsub.f32 %v48, %v550
    %v552 = vand.u32 %v551, 4294901760
    %553 = vmatpush1.xpose.msra.mxu0 %v552
    %554 = vmatprep.subr.mxu0 0.0
    %v555 = vand.u32 %v49, 4294901760
    %v556 = vsub.f32 %v49, %v555
    %v557 = vand.u32 %v556, 4294901760
    %558 = vmatpush1.xpose.msra.mxu0 %v557
    %559 = vmatprep.subr.mxu0 0.0
    %v560 = vand.u32 %v50, 4294901760
    %v561 = vsub.f32 %v50, %v560
    %v562 = vand.u32 %v561, 4294901760
    %563 = vmatpush1.xpose.msra.mxu0 %v562
    %564 = vmatprep.subr.mxu0 0.0
    %v565 = vand.u32 %v51, 4294901760
    %v566 = vsub.f32 %v51, %v565
    %v567 = vand.u32 %v566, 4294901760
    %568 = vmatpush1.xpose.msra.mxu0 %v567
    %569 = vmatprep.subr.mxu0 0.0
    %v570 = vand.u32 %v52, 4294901760
    %v571 = vsub.f32 %v52, %v570
    %v572 = vand.u32 %v571, 4294901760
    %573 = vmatpush1.xpose.msra.mxu0 %v572
    %574 = vmatprep.subr.mxu0 0.0
    %v575 = vand.u32 %v53, 4294901760
    %v576 = vsub.f32 %v53, %v575
    %v577 = vand.u32 %v576, 4294901760
    %578 = vmatpush1.xpose.msra.mxu0 %v577
    %579 = vmatprep.subr.mxu0 0.0
    %v580 = vand.u32 %v54, 4294901760
    %v581 = vsub.f32 %v54, %v580
    %v582 = vand.u32 %v581, 4294901760
    %583 = vmatpush1.xpose.msra.mxu0 %v582
    %584 = vmatprep.subr.mxu0 0.0
    %v585 = vand.u32 %v55, 4294901760
    %v586 = vsub.f32 %v55, %v585
    %v587 = vand.u32 %v586, 4294901760
    %588 = vmatpush1.xpose.msra.mxu0 %v587
    %589 = vmatprep.subr.mxu0 0.0
    %v590 = vand.u32 %v56, 4294901760
    %v591 = vsub.f32 %v56, %v590
    %v592 = vand.u32 %v591, 4294901760
    %593 = vmatpush1.xpose.msra.mxu0 %v592
    %594 = vmatprep.subr.mxu0 0.0
    %v595 = vand.u32 %v57, 4294901760
    %v596 = vsub.f32 %v57, %v595
    %v597 = vand.u32 %v596, 4294901760
    %598 = vmatpush1.xpose.msra.mxu0 %v597
    %599 = vmatprep.subr.mxu0 0.0
    %v600 = vand.u32 %v58, 4294901760
    %v601 = vsub.f32 %v58, %v600
    %v602 = vand.u32 %v601, 4294901760
    %603 = vmatpush1.xpose.msra.mxu0 %v602
    %604 = vmatprep.subr.mxu0 0.0
    %v605 = vand.u32 %v59, 4294901760
    %v606 = vsub.f32 %v59, %v605
    %v607 = vand.u32 %v606, 4294901760
    %608 = vmatpush1.xpose.msra.mxu0 %v607
    %609 = vmatprep.subr.mxu0 0.0
    %v610 = vand.u32 %v60, 4294901760
    %v611 = vsub.f32 %v60, %v610
    %v612 = vand.u32 %v611, 4294901760
    %613 = vmatpush1.xpose.msra.mxu0 %v612
    %614 = vmatprep.subr.mxu0 0.0
    %615 = vmatpush1.xpose.msra.mxu0 0.0
    %616 = vmatprep.subr.mxu0 0.0
    %617 = vmatpush1.xpose.msra.mxu0 0.0
    %618 = vmatprep.subr.mxu0 0.0
    %619 = vmatpush1.xpose.msra.mxu0 0.0
    %620 = vmatprep.subr.mxu0 0.0
    %621 = vmatpush1.xpose.msra.mxu0 0.0
    %622 = vmatprep.subr.mxu0 0.0
    %623 = vmatpush1.xpose.msra.mxu0 0.0
    %624 = vmatprep.subr.mxu0 0.0
    %625 = vmatpush1.xpose.msra.mxu0 0.0
    %626 = vmatprep.subr.mxu0 0.0
    %627 = vmatpush1.xpose.msra.mxu0 0.0
    %628 = vmatprep.subr.mxu0 0.0
    %629 = vmatpush1.xpose.msra.mxu0 0.0
    %630 = vmatprep.subr.mxu0 0.0
    %631 = vmatpush1.xpose.msra.mxu0 0.0
    %632 = vmatprep.subr.mxu0 0.0
    %633 = vmatpush1.xpose.msra.mxu0 0.0
    %634 = vmatprep.subr.mxu0 0.0
    %635 = vmatpush1.xpose.msra.mxu0 0.0
    %636 = vmatprep.subr.mxu0 0.0
    %637 = vmatpush1.xpose.msra.mxu0 0.0
    %638 = vmatprep.subr.mxu0 0.0
    %639 = vmatpush1.xpose.msra.mxu0 0.0
    %640 = vmatprep.subr.mxu0 0.0
    %641 = vmatpush1.xpose.msra.mxu0 0.0
    %642 = vmatprep.subr.mxu0 0.0
    %643 = vmatpush1.xpose.msra.mxu0 0.0
    %644 = vmatprep.subr.mxu0 0.0
    %645 = vmatpush1.xpose.msra.mxu0 0.0
    %646 = vmatprep.mubr.f32.mxu0 0.0
    %v647 = vand.u32 %v43, 4294901760
    %648 = vmatmul.mubr.f32.gmra.mrb[0].mxu0 %v647
    %v649 = vpop.f32.mrb[0].mxu0
    %v650 = vadd.f32 %v523, %v649
    %v651 = vpop.f32.mrb[0].mxu0
    %652 = vmatprep.mubr.f32.mxu0 0.0
    %v653 = vand.u32 %v44, 4294901760
    %654 = vmatmul.mubr.f32.gmra.mrb[0].mxu0 %v653
    %v655 = vpop.f32.mrb[0].mxu0
    %v656 = vadd.f32 %v531, %v655
    %v657 = vpop.f32.mrb[0].mxu0
    %658 = vdwg.mxu0
    %659 = vmatprep.subr.mxu0 0.0
    %v660 = vand.u32 %v45, 4294901760
    %661 = vmatpush1.xpose.msra.mxu0 %v660
    %662 = vmatprep.subr.mxu0 0.0
    %v663 = vand.u32 %v46, 4294901760
    %664 = vmatpush1.xpose.msra.mxu0 %v663
    %665 = vmatprep.subr.mxu0 0.0
    %v666 = vand.u32 %v47, 4294901760
    %667 = vmatpush1.xpose.msra.mxu0 %v666
    %668 = vmatprep.subr.mxu0 0.0
    %v669 = vand.u32 %v48, 4294901760
    %670 = vmatpush1.xpose.msra.mxu0 %v669
    %671 = vmatprep.subr.mxu0 0.0
    %v672 = vand.u32 %v49, 4294901760
    %673 = vmatpush1.xpose.msra.mxu0 %v672
    %674 = vmatprep.subr.mxu0 0.0
    %v675 = vand.u32 %v50, 4294901760
    %676 = vmatpush1.xpose.msra.mxu0 %v675
    %677 = vmatprep.subr.mxu0 0.0
    %v678 = vand.u32 %v51, 4294901760
    %679 = vmatpush1.xpose.msra.mxu0 %v678
    %680 = vmatprep.subr.mxu0 0.0
    %v681 = vand.u32 %v52, 4294901760
    %682 = vmatpush1.xpose.msra.mxu0 %v681
    %683 = vmatprep.subr.mxu0 0.0
    %v684 = vand.u32 %v53, 4294901760
    %685 = vmatpush1.xpose.msra.mxu0 %v684
    %686 = vmatprep.subr.mxu0 0.0
    %v687 = vand.u32 %v54, 4294901760
    %688 = vmatpush1.xpose.msra.mxu0 %v687
    %689 = vmatprep.subr.mxu0 0.0
    %v690 = vand.u32 %v55, 4294901760
    %691 = vmatpush1.xpose.msra.mxu0 %v690
    %692 = vmatprep.subr.mxu0 0.0
    %v693 = vand.u32 %v56, 4294901760
    %694 = vmatpush1.xpose.msra.mxu0 %v693
    %695 = vmatprep.subr.mxu0 0.0
    %v696 = vand.u32 %v57, 4294901760
    %697 = vmatpush1.xpose.msra.mxu0 %v696
    %698 = vmatprep.subr.mxu0 0.0
    %v699 = vand.u32 %v58, 4294901760
    %700 = vmatpush1.xpose.msra.mxu0 %v699
    %701 = vmatprep.subr.mxu0 0.0
    %v702 = vand.u32 %v59, 4294901760
    %703 = vmatpush1.xpose.msra.mxu0 %v702
    %704 = vmatprep.subr.mxu0 0.0
    %v705 = vand.u32 %v60, 4294901760
    %706 = vmatpush1.xpose.msra.mxu0 %v705
    %707 = vmatprep.subr.mxu0 0.0
    %708 = vmatpush1.xpose.msra.mxu0 0.0
    %709 = vmatprep.subr.mxu0 0.0
    %710 = vmatpush1.xpose.msra.mxu0 0.0
    %711 = vmatprep.subr.mxu0 0.0
    %712 = vmatpush1.xpose.msra.mxu0 0.0
    %713 = vmatprep.subr.mxu0 0.0
    %714 = vmatpush1.xpose.msra.mxu0 0.0
    %715 = vmatprep.subr.mxu0 0.0
    %716 = vmatpush1.xpose.msra.mxu0 0.0
    %717 = vmatprep.subr.mxu0 0.0
    %718 = vmatpush1.xpose.msra.mxu0 0.0
    %719 = vmatprep.subr.mxu0 0.0
    %720 = vmatpush1.xpose.msra.mxu0 0.0
    %721 = vmatprep.subr.mxu0 0.0
    %722 = vmatpush1.xpose.msra.mxu0 0.0
    %723 = vmatprep.subr.mxu0 0.0
    %724 = vmatpush1.xpose.msra.mxu0 0.0
    %725 = vmatprep.subr.mxu0 0.0
    %726 = vmatpush1.xpose.msra.mxu0 0.0
    %727 = vmatprep.subr.mxu0 0.0
    %728 = vmatpush1.xpose.msra.mxu0 0.0
    %729 = vmatprep.subr.mxu0 0.0
    %730 = vmatpush1.xpose.msra.mxu0 0.0
    %731 = vmatprep.subr.mxu0 0.0
    %732 = vmatpush1.xpose.msra.mxu0 0.0
    %733 = vmatprep.subr.mxu0 0.0
    %734 = vmatpush1.xpose.msra.mxu0 0.0
    %735 = vmatprep.subr.mxu0 0.0
    %736 = vmatpush1.xpose.msra.mxu0 0.0
    %737 = vmatprep.subr.mxu0 0.0
    %738 = vmatpush1.xpose.msra.mxu0 0.0
    %739 = vmatprep.mubr.f32.mxu0 0.0
    %v740 = vand.u32 %v43, 4294901760
    %741 = vmatmul.mubr.f32.gmra.mrb[0].mxu0 %v740
    %v742 = vpop.f32.mrb[0].mxu0
    %v743 = vadd.f32 %v650, %v742
    %v744 = vpop.f32.mrb[0].mxu0
    %745 = vmatprep.mubr.f32.mxu0 0.0
    %v746 = vand.u32 %v44, 4294901760
    %747 = vmatmul.mubr.f32.gmra.mrb[0].mxu0 %v746
    %v748 = vpop.f32.mrb[0].mxu0
    %v749 = vadd.f32 %v656, %v748
    %v750 = vpop.f32.mrb[0].mxu0
    %751 = vdwg.mxu0
    %v752 = vmax.f32 %v743, 0.0
    %v753 = vmax.f32 %v749, 0.0
    %754 = vst [vmem:[#allocation7] sm:$0xff] %v752
    %755 = vst [vmem:[#allocation7 + $0x8] sm:$0xff] %v753
    // Predicated region
    $region22: #{tpu_custom_call.1} parent=1 // pred_check
      _
    $region23: #{tpu_custom_call.1} parent=1 // pred_check_branch
      %757 = sbr.rel (0) target = $region25
    $region24: #{tpu_custom_call.1} parent=1 // pred_region
      %s759 = ssub.s32 256, 256
      %760 = vsyncadd [#allocation4], %s759
      %s761 = sshll.u32 [#allocation7], 4
      %s762 = int_to_ptr.vmem [resolvable:$true] %s761
      %767 = dma.vmem_to_hbm [thread:$0]  %s762, 256, %s3, [#allocation4], 128, 128, 8
    $region25: #{tpu_custom_call.1} parent=1 // pred_fallthru
      _
    // Predicated region
    $region26: #{tpu_custom_call.1} parent=1 // pred_check
      _
    $region27: #{tpu_custom_call.1} parent=1 // pred_check_branch
      %769 = sbr.rel (0) target = $region29
    $region28: #{tpu_custom_call.1} parent=1 // pred_region
      %770 = dma.done [#allocation4], 256
    $region29: #{tpu_custom_call.1} parent=1 // pred_fallthru
      _
    %771 = vsyncpa [#allocation3], 1
    %772 = vsyncpa [#allocation6], 1
    %773 = vsyncpa [#allocation4], 1

</llo_original>
